<compile_context>
chip_gen: v7x
topology: tpu7x:2x2x1
jax: 0.10.0
libtpu: 0.0.40
codegen_flags: <defaults>
</compile_context>

<pallas_src>
import jax
import jax.numpy as jnp
import numpy as np
from jax.experimental import pallas as pl
from jax.experimental.pallas import tpu as pltpu

EMBED_DIM = 32
NUM_HEADS = 8
HEAD_DIM = EMBED_DIM // NUM_HEADS  # 4
BATCH = 2
SEQ = 4

_TM_MAX = 512  # row-tile upper bound


def _multihead_linear_kernel(x_ref, w_ref, b_ref, o_ref):
    # x_ref: (TM, E), w_ref: (E, H*Dh), b_ref: (1, H*Dh), o_ref: (TM, H*Dh)
    acc = jnp.dot(x_ref[...], w_ref[...], preferred_element_type=jnp.float32)
    o_ref[...] = (acc + b_ref[...]).astype(o_ref.dtype)


def pack_params(weights, biases):
    """Pack per-head torch-style Linear params (W_h: (Dh, E), b_h: (Dh,)) into
    a single (E, H*Dh) weight and (1, H*Dh) bias. Call once at init."""
    w_packed = jnp.concatenate([w.T for w in weights], axis=1).astype(jnp.float32)
    b_packed = jnp.concatenate(biases, axis=0).reshape(1, -1).astype(jnp.float32)
    return w_packed, b_packed


@jax.jit
def multiple_linears(x, w_packed, b_packed):
    """x: (B, S, E) f32. w_packed: (E, H*Dh). b_packed: (1, H*Dh).
    Returns (B, S, NUM_HEADS, HEAD_DIM), matching torch.stack(head_outputs, 2)."""
    B, S, E = x.shape
    n_out = w_packed.shape[1]
    rows = B * S
    x2d = x.reshape(rows, E)

    # Static row-tile choice (shapes are static under jit); keep sublane (8)
    # alignment, cap at _TM_MAX.
    tm = min(_TM_MAX, max(8, ((rows + 7) // 8) * 8))
    padded_rows = pl.cdiv(rows, tm) * tm
    if padded_rows != rows:
        x2d = jnp.pad(x2d, ((0, padded_rows - rows), (0, 0)))

    out2d = pl.pallas_call(
        _multihead_linear_kernel,
        out_shape=jax.ShapeDtypeStruct((padded_rows, n_out), jnp.float32),
        grid=(padded_rows // tm,),
        in_specs=[
            pl.BlockSpec((tm, E), lambda i: (i, 0), memory_space=pltpu.VMEM),
            # Weights / bias stay VMEM-resident across the row grid (index
            # map is constant -> DMA'd once, reused every iteration).
            pl.BlockSpec((E, n_out), lambda i: (0, 0), memory_space=pltpu.VMEM),
            pl.BlockSpec((1, n_out), lambda i: (0, 0), memory_space=pltpu.VMEM),
        ],
        out_specs=pl.BlockSpec((tm, n_out), lambda i: (i, 0),
                               memory_space=pltpu.VMEM),
        compiler_params=pltpu.CompilerParams(
            dimension_semantics=("parallel",)),
    )(x2d, w_packed, b_packed)

    if padded_rows != rows:
        out2d = out2d[:rows]
    return out2d.reshape(B, S, NUM_HEADS, HEAD_DIM)


def _reference(x, weights, biases):
    # Pure-JAX reference mirroring the torch module: per-head x @ W.T + b, stacked.
    head_outs = [x @ w.T + b for w, b in zip(weights, biases)]
    return jnp.stack(head_outs, axis=2)


if __name__ == "__main__":
    key = jax.random.PRNGKey(0)
    kx, *kws = jax.random.split(key, 1 + 2 * NUM_HEADS)

    x = jax.random.normal(kx, (BATCH, SEQ, EMBED_DIM), dtype=jnp.float32)

    # Deterministic parameter init (uniform(-bound, bound) like torch Linear default).
    bound = 1.0 / np.sqrt(EMBED_DIM)
    weights, biases = [], []
    for h in range(NUM_HEADS):
        weights.append(jax.random.uniform(
            kws[2 * h], (HEAD_DIM, EMBED_DIM), jnp.float32, -bound, bound))
        biases.append(jax.random.uniform(
            kws[2 * h + 1], (HEAD_DIM,), jnp.float32, -bound, bound))

    # Pack once, outside the hot path.
    w_packed, b_packed = pack_params(weights, biases)

    out = multiple_linears(x, w_packed, b_packed)
    out = jax.block_until_ready(out)

    ref = _reference(x, weights, biases)
    assert out.shape == (BATCH, SEQ, NUM_HEADS, HEAD_DIM), out.shape
    np.testing.assert_allclose(np.asarray(out), np.asarray(ref), rtol=1e-5, atol=1e-5)

    print("KERNEL_OK")
</pallas_src>

<mosaic_0001>
module attributes {stable_mosaic.version = 11 : i64} {
  func.func @_multihead_linear_kernel(%arg0: i32, %arg1: memref<8x32xf32, #tpu.memory_space<vmem>>, %arg2: memref<32x32xf32, #tpu.memory_space<vmem>>, %arg3: memref<1x32xf32, #tpu.memory_space<vmem>>, %arg4: memref<8x32xf32, #tpu.memory_space<vmem>>) attributes {dimension_semantics = [#tpu.dimension_semantics<parallel>], iteration_bounds = array<i64: 1>, scalar_prefetch = 0 : i64, scratch_operands = 0 : i64, tpu.core_type = #tpu.core_type<tc>, window_params = [{transform_indices = @transform_0, window_bounds = array<i64: 8, 32>}, {pipeline_mode = #tpu.pipeline_mode<synchronous>, transform_indices = @transform_1, window_bounds = array<i64: 32, 32>}, {pipeline_mode = #tpu.pipeline_mode<synchronous>, transform_indices = @transform_2, window_bounds = array<i64: 1, 32>}, {transform_indices = @transform_3, window_bounds = array<i64: 8, 32>}]} {
    %c0 = arith.constant 0 : index
    %c0_0 = arith.constant 0 : index
    %0 = vector.load %arg1[%c0, %c0_0] : memref<8x32xf32, #tpu.memory_space<vmem>>, vector<8x32xf32>
    %c0_1 = arith.constant 0 : index
    %c0_2 = arith.constant 0 : index
    %1 = vector.load %arg2[%c0_1, %c0_2] : memref<32x32xf32, #tpu.memory_space<vmem>>, vector<32x32xf32>
    %cst = arith.constant dense<0.000000e+00> : vector<8x32xf32>
    %2 = tpu.matmul %0, %1, %cst {dimension_numbers = #tpu.dot_dimension_numbers<[1], [0], [0], [1], [0, 0, 1, 1], [], []>} : vector<8x32xf32>, vector<32x32xf32>, vector<8x32xf32> -> vector<8x32xf32>
    %c0_3 = arith.constant 0 : index
    %c0_4 = arith.constant 0 : index
    %3 = vector.load %arg3[%c0_3, %c0_4] : memref<1x32xf32, #tpu.memory_space<vmem>>, vector<1x32xf32>
    %4 = vector.broadcast %3 : vector<1x32xf32> to vector<8x32xf32>
    %5 = arith.addf %2, %4 : vector<8x32xf32>
    %c0_5 = arith.constant 0 : index
    %c0_6 = arith.constant 0 : index
    %6 = vector.load %arg4[%c0_5, %c0_6] : memref<8x32xf32, #tpu.memory_space<vmem>>, vector<8x32xf32>
    tpu.vector_store %arg4[%c0_5, %c0_6], %5 {strides = array<i32>} : memref<8x32xf32, #tpu.memory_space<vmem>>, vector<8x32xf32>,
    return
  }
  func.func @transform_0(%arg0: i32) -> (i32, i32) {
    %c0_i32 = arith.constant 0 : i32
    %c0_i32_0 = arith.constant 0 : i32
    return %arg0, %c0_i32 : i32, i32
  }
  func.func @transform_1(%arg0: i32) -> (i32, i32) {
    %c0_i32 = arith.constant 0 : i32
    %c0_i32_0 = arith.constant 0 : i32
    %c0_i32_1 = arith.constant 0 : i32
    return %c0_i32, %c0_i32_0 : i32, i32
  }
  func.func @transform_2(%arg0: i32) -> (i32, i32) {
    %c0_i32 = arith.constant 0 : i32
    %c0_i32_0 = arith.constant 0 : i32
    %c0_i32_1 = arith.constant 0 : i32
    return %c0_i32, %c0_i32_0 : i32, i32
  }
  func.func @transform_3(%arg0: i32) -> (i32, i32) {
    %c0_i32 = arith.constant 0 : i32
    %c0_i32_0 = arith.constant 0 : i32
    return %arg0, %c0_i32 : i32, i32
  }
}

</mosaic_0001>

<llo_original>
// kernel: multiple_linears.1
$region0: #{multiple_linears.1}
  #allocation0 [shape = 'u32[]', space=smem, size = 0x4, offset = 0x4, fixed_abs, tag = 'smem constant byte address 0x4 - core index']
  #allocation1 [shape = 'u32[144,128]{1,0:T(1,128)}', space=vmem, size = 0x12000, scoped, tag = 'internal scratch']
  %s0 = inlined_call_operand.hbm [shape: f32[8,32], index: 0, kind: input, shape index: {}]
  %s1 = inlined_call_operand.hbm [shape: f32[32,32], index: 1, kind: input, shape index: {}]
  %s2 = inlined_call_operand.vmem [shape: f32[1,32], index: 2, kind: input, shape index: {}]
  %s3 = inlined_call_operand.vmem [shape: f32[8,32], index: 3, kind: output, shape index: {}]
  %s4 = sld [smem:[#allocation0]]
  $region30: #{multiple_linears.1} parent=0
    _
  %s6 = ssub.s32 1, %s4
  %s7 = scalar_select 0, %s6, %s4
  $region1: #{multiple_linears.1} parent=0
    #allocation2 [shape = 'u8[4096]{0}', space=vmem, size = 0x1000, scoped, tag = 'input window, operand 0, single buffered']
    #allocation3 [shape = 's32[1]{0}', space=sflag, size = 0x4, scoped, tag = 'scoped memory for multiple_linears.1']
    #allocation4 [shape = 'u8[16384]{0}', space=vmem, size = 0x4000, scoped, tag = 'input window, operand 1, single buffered']
    #allocation5 [shape = 's32[1]{0}', space=sflag, size = 0x4, scoped, tag = 'scoped memory for multiple_linears.1']
    %8 = vsyncpa [#allocation3], 0
    %9 = vsyncpa [#allocation5], 0
    // Predicated region
    $region2: #{multiple_linears.1} parent=1 // pred_check
      _
    $region3: #{multiple_linears.1} parent=1 // pred_check_branch
      %11 = sbr.rel (0) target = $region5
    $region4: #{multiple_linears.1} parent=1 // pred_region
      %s13 = ssub.s32 128, 128
      %14 = vsyncadd [#allocation3], %s13
      %s16 = sshll.u32 [#allocation2], 4
      %s17 = int_to_ptr.vmem [resolvable:$true] %s16
      %19 = dma.hbm_to_vmem [thread:$0]  %s0, 128, %s17, [#allocation3]
    $region5: #{multiple_linears.1} parent=1 // pred_fallthru
      _
    // Predicated region
    $region6: #{multiple_linears.1} parent=1 // pred_check
      _
    $region7: #{multiple_linears.1} parent=1 // pred_check_branch
      %21 = sbr.rel (0) target = $region9
    $region8: #{multiple_linears.1} parent=1 // pred_region
      %s23 = ssub.s32 512, 512
      %24 = vsyncadd [#allocation5], %s23
      %s25 = sshll.u32 [#allocation4], 4
      %s26 = int_to_ptr.vmem [resolvable:$true] %s25
      %31 = dma.hbm_to_vmem [thread:$0]  %s1, 512, %s26, [#allocation5], 128, 128, 8
    $region9: #{multiple_linears.1} parent=1 // pred_fallthru
      _
    // Predicated region
    $region10: #{multiple_linears.1} parent=1 // pred_check
      _
    $region11: #{multiple_linears.1} parent=1 // pred_check_branch
      %33 = sbr.rel (0) target = $region13
    $region12: #{multiple_linears.1} parent=1 // pred_region
      _
    $region13: #{multiple_linears.1} parent=1 // pred_fallthru
      _
    // Predicated region
    $region14: #{multiple_linears.1} parent=1 // pred_check
      _
    $region15: #{multiple_linears.1} parent=1 // pred_check_branch
      %35 = sbr.rel (0) target = $region17
    $region16: #{multiple_linears.1} parent=1 // pred_region
      %36 = dma.done [#allocation3], 128
    $region17: #{multiple_linears.1} parent=1 // pred_fallthru
      _
    // Predicated region
    $region18: #{multiple_linears.1} parent=1 // pred_check
      _
    $region19: #{multiple_linears.1} parent=1 // pred_check_branch
      %38 = sbr.rel (0) target = $region21
    $region20: #{multiple_linears.1} parent=1 // pred_region
      %39 = dma.done [#allocation5], 512
    $region21: #{multiple_linears.1} parent=1 // pred_fallthru
      _
    %v40 = vld [vmem:[#allocation2] sm:$0xff]
    %v41 = vld [vmem:[#allocation4] sm:$0xff]
    %v42 = vld [vmem:[#allocation4 + $0x8] sm:$0xff]
    %v43 = vld [vmem:[#allocation4 + $0x10] sm:$0xff]
    %v44 = vld [vmem:[#allocation4 + $0x18] sm:$0xff]
    %v45 = vld [vmem:[%s2] sm:$0x1]
    %v47 = vlaneseq
    %v48 = vshrl.u32 %v47, 7
    %v49 = vsub.s32 0, %v48
    %v50 = vrot.slane %v45, %v49
    %vm52 = vcmask 261120
    %v54 = vsel %vm52, %v40, 0
    %56 = vmatprep.subr.mxu0 0.0
    %57 = vmatpush1.msra.mxu0 %v41
    %58 = vmatprep.subr.mxu0 0.0
    %59 = vmatpush1.msra.mxu0 %v42
    %60 = vmatprep.subr.mxu0 0.0
    %61 = vmatpush1.msra.mxu0 %v43
    %62 = vmatprep.subr.mxu0 0.0
    %63 = vmatpush1.msra.mxu0 %v44
    %64 = vmatprep.subr.mxu0 0.0
    %65 = vmatpush1.msra.mxu0 0.0
    %66 = vmatprep.subr.mxu0 0.0
    %67 = vmatpush1.msra.mxu0 0.0
    %68 = vmatprep.subr.mxu0 0.0
    %69 = vmatpush1.msra.mxu0 0.0
    %70 = vmatprep.subr.mxu0 0.0
    %71 = vmatpush1.msra.mxu0 0.0
    %72 = vmatprep.subr.mxu0 0.0
    %73 = vmatpush1.msra.mxu0 0.0
    %74 = vmatprep.subr.mxu0 0.0
    %75 = vmatpush1.msra.mxu0 0.0
    %76 = vmatprep.subr.mxu0 0.0
    %77 = vmatpush1.msra.mxu0 0.0
    %78 = vmatprep.subr.mxu0 0.0
    %79 = vmatpush1.msra.mxu0 0.0
    %80 = vmatprep.subr.mxu0 0.0
    %81 = vmatpush1.msra.mxu0 0.0
    %82 = vmatprep.subr.mxu0 0.0
    %83 = vmatpush1.msra.mxu0 0.0
    %84 = vmatprep.subr.mxu0 0.0
    %85 = vmatpush1.msra.mxu0 0.0
    %86 = vmatprep.subr.mxu0 0.0
    %87 = vmatpush1.msra.mxu0 0.0
    %88 = vmatprep.subr.mxu0 0.0
    %89 = vmatpush1.msra.mxu0 0.0
    %90 = vmatprep.subr.mxu0 0.0
    %91 = vmatpush1.msra.mxu0 0.0
    %92 = vmatprep.subr.mxu0 0.0
    %93 = vmatpush1.msra.mxu0 0.0
    %94 = vmatprep.subr.mxu0 0.0
    %95 = vmatpush1.msra.mxu0 0.0
    %96 = vmatprep.subr.mxu0 0.0
    %97 = vmatpush1.msra.mxu0 0.0
    %98 = vmatprep.subr.mxu0 0.0
    %99 = vmatpush1.msra.mxu0 0.0
    %100 = vmatprep.subr.mxu0 0.0
    %101 = vmatpush1.msra.mxu0 0.0
    %102 = vmatprep.subr.mxu0 0.0
    %103 = vmatpush1.msra.mxu0 0.0
    %104 = vmatprep.subr.mxu0 0.0
    %105 = vmatpush1.msra.mxu0 0.0
    %106 = vmatprep.subr.mxu0 0.0
    %107 = vmatpush1.msra.mxu0 0.0
    %108 = vmatprep.subr.mxu0 0.0
    %109 = vmatpush1.msra.mxu0 0.0
    %110 = vmatprep.subr.mxu0 0.0
    %111 = vmatpush1.msra.mxu0 0.0
    %112 = vmatprep.subr.mxu0 0.0
    %113 = vmatpush1.msra.mxu0 0.0
    %114 = vmatprep.subr.mxu0 0.0
    %115 = vmatpush1.msra.mxu0 0.0
    %116 = vmatprep.subr.mxu0 0.0
    %117 = vmatpush1.msra.mxu0 0.0
    %118 = vmatprep.subr.mxu0 0.0
    %119 = vmatpush1.msra.mxu0 0.0
    %120 = vmatprep.mubr.f32.mxu0 0.0
    %121 = vmatmul.mubr.f32.gmra.mrb[0].mxu0 %v54
    %v122 = vpop.f32.mrb[0].mxu0
    %v123 = vadd.f32 %v50, %v122
    %v124 = vpop.f32.mrb[0].mxu0
    %125 = vdwg.mxu0
    %126 = vst.msk [vmem:[%s3] sm:$0xff] %vm52, %v123
    // Predicated region
    $region22: #{multiple_linears.1} parent=1 // pred_check
      _
    $region23: #{multiple_linears.1} parent=1 // pred_check_branch
      %128 = sbr.rel (0) target = $region25
    $region24: #{multiple_linears.1} parent=1 // pred_region
      _
    $region25: #{multiple_linears.1} parent=1 // pred_fallthru
      _
    // Predicated region
    $region26: #{multiple_linears.1} parent=1 // pred_check
      _
    $region27: #{multiple_linears.1} parent=1 // pred_check_branch
      %130 = sbr.rel (0) target = $region29
    $region28: #{multiple_linears.1} parent=1 // pred_region
      _
    $region29: #{multiple_linears.1} parent=1 // pred_fallthru
      _
    %131 = vsyncpa [#allocation3], 1
    %132 = vsyncpa [#allocation5], 1

</llo_original>
